<compile_context>
chip_gen: v5e
topology: v5e:2x2
jax: 0.10.0
libtpu: 0.0.40
codegen_flags: <defaults>
</compile_context>

<pallas_src>
import jax
import jax.numpy as jnp
from jax.experimental import pallas as pl
from jax.experimental.pallas import tpu as pltpu


# --------------------------------------------------------------------------
# helpers
# --------------------------------------------------------------------------
def _round_up(x, m):
    return (x + m - 1) // m * m


def _pad2d(a, shape):
    return jnp.pad(a, ((0, shape[0] - a.shape[0]), (0, shape[1] - a.shape[1])))


def _pad_row(v, n):
    return jnp.pad(v, (0, n - v.shape[0])).reshape(1, n)


# --------------------------------------------------------------------------
# kernel: batch-tiled fused (BN-folded) Linear x3 + ReLU.
# Weights / biases are resident in VMEM (constant index_map, Buffered(1));
# x and out stream per batch tile (double-buffered).
# --------------------------------------------------------------------------
def _subnet_fwd_kernel(x_ref, w1_ref, b1_ref, w2_ref, b2_ref, w3_ref, b3_ref,
                       out_ref):
    mm_dtype = w1_ref.dtype        # bf16 by default; fp32 accumulation on MXU
    x = x_ref[...]                 # fp32 (BN is already folded into w1/b1)

    y1 = jnp.dot(x.astype(mm_dtype), w1_ref[...],
                 preferred_element_type=jnp.float32)
    y1 = jnp.maximum(y1 + b1_ref[...], 0.0)

    y2 = jnp.dot(y1.astype(mm_dtype), w2_ref[...],
                 preferred_element_type=jnp.float32)
    y2 = jnp.maximum(y2 + b2_ref[...], 0.0)

    y3 = jnp.dot(y2.astype(mm_dtype), w3_ref[...],
                 preferred_element_type=jnp.float32)
    y3 = jnp.maximum(y3 + b3_ref[...], 0.0)

    out_ref[...] = y3.astype(out_ref.dtype)


# --------------------------------------------------------------------------
# wrapper
# --------------------------------------------------------------------------
def subnet_forward(x, params, *, tile_b=512, matmul_dtype=jnp.bfloat16,
                   out_dtype=jnp.float32, eps=1e-5):
    """x: (batch, in_size) float32.  params: dict of arrays (see init_params)."""
    batch, in_size = x.shape
    hidden = params["w1"].shape[1]
    h = _round_up(hidden, 128)          # lane-dense hidden / output dim

    x32 = x.astype(jnp.float32)

    # ---- BatchNorm statistics (two-pass, fp32) + fold into first Linear ----
    # Plain jnp reduction: trivially HBM-bound, XLA runs it at roofline; this
    # avoids an extra Pallas launch and avoids one-pass variance cancellation.
    mean = jnp.mean(x32, axis=0)
    var = jnp.mean(jnp.square(x32 - mean), axis=0)          # biased variance
    scale = params["gamma"].astype(jnp.float32) * jax.lax.rsqrt(var + eps)
    shift = params["beta"].astype(jnp.float32) - mean * scale

    w1_f32 = params["w1"].astype(jnp.float32)
    w1_fold = w1_f32 * scale[:, None]                        # (in_size, hidden)
    b1_fold = params["b1"].astype(jnp.float32) + shift @ w1_f32

    # Pad only the hidden (N) dim; x is used unpadded (no extra HBM copy).
    w1 = _pad2d(w1_fold, (in_size, h)).astype(matmul_dtype)
    w2 = _pad2d(params["w2"].astype(jnp.float32), (h, h)).astype(matmul_dtype)
    w3 = _pad2d(params["w3"].astype(jnp.float32), (h, h)).astype(matmul_dtype)
    b1 = _pad_row(b1_fold, h)
    b2 = _pad_row(params["b2"].astype(jnp.float32), h)
    b3 = _pad_row(params["b3"].astype(jnp.float32), h)

    # ---- batch tiling: big tiles, but >= 2 grid steps when batch allows ----
    tb_cap = _round_up(max(pl.cdiv(batch, 2), 1), 8)   # 2 tiles -> both v7x TCs
    tb = min(_round_up(tile_b, 8), tb_cap, _round_up(batch, 8))
    if batch < 8:
        tb = batch                                     # block == full batch dim
    n_tiles = pl.cdiv(batch, tb)

    # ---- VMEM budget (single-buffered weights, double-buffered x/out) ------
    mm_bytes = jnp.dtype(matmul_dtype).itemsize
    out_bytes = jnp.dtype(out_dtype).itemsize
    w_bytes = (in_size * h + 2 * h * h) * mm_bytes           # Buffered(1)
    bias_bytes = 3 * h * 4
    stream_bytes = 2 * tb * in_size * 4 + 2 * tb * h * out_bytes
    inter_bytes = 3 * tb * h * 4                             # y1/y2/y3 fp32
    est_vmem = w_bytes + bias_bytes + stream_bytes + inter_bytes
    vmem_limit = int(min(max(est_vmem + (8 << 20), 32 << 20), 56 << 20))
    # TODO(synk): if (in_size*h + 2*h*h)*mm_bytes grows beyond ~20 MiB the
    # resident-weight scheme should fall back to a hidden-dim-tiled grid with
    # an fp32 VMEM accumulator; not needed at SubNet-scale hidden sizes.

    flops = 2 * batch * (in_size * h + 2 * h * h)
    bytes_accessed = int(batch * in_size * 4 + w_bytes + bias_bytes
                         + batch * h * out_bytes)

    const_blk = lambda i: (0, 0)         # resident operands: DMA'd once
    resident = lambda shape: pl.BlockSpec(shape, const_blk,
                                          pipeline_mode=pl.Buffered(1))

    out_padded = pl.pallas_call(
        _subnet_fwd_kernel,
        out_shape=jax.ShapeDtypeStruct((batch, h), out_dtype),
        grid_spec=pltpu.PrefetchScalarGridSpec(
            num_scalar_prefetch=0,
            grid=(n_tiles,),
            in_specs=[
                pl.BlockSpec((tb, in_size), lambda i: (i, 0)),   # x (streamed)
                resident((in_size, h)),                          # w1 (BN folded)
                resident((1, h)),                                # b1 (BN folded)
                resident((h, h)),                                # w2
                resident((1, h)),                                # b2
                resident((h, h)),                                # w3
                resident((1, h)),                                # b3
            ],
            out_specs=pl.BlockSpec((tb, h), lambda i: (i, 0)),
        ),
        compiler_params=pltpu.CompilerParams(
            dimension_semantics=("parallel",),    # batch tiles independent
            vmem_limit_bytes=vmem_limit),
        cost_estimate=pl.CostEstimate(
            flops=flops, transcendentals=0, bytes_accessed=bytes_accessed),
    )(x32, w1, b1, w2, b2, w3, b3)

    return out_padded[:, :hidden]


# --------------------------------------------------------------------------
# parameters + pure-JAX reference (mirrors the kernel numerics)
# --------------------------------------------------------------------------
def init_params(key, in_size, hidden_size):
    """Deterministic synthetic parameters (xavier-normal-like weights)."""
    k1, k2, k3, k4, k5 = jax.random.split(key, 5)

    def xavier(k, fan_in, fan_out):
        std = (2.0 / (fan_in + fan_out)) ** 0.5
        return std * jax.random.normal(k, (fan_in, fan_out), jnp.float32)

    return {
        "gamma": 1.0 + 0.1 * jax.random.normal(k4, (in_size,), jnp.float32),
        "beta": 0.1 * jax.random.normal(k5, (in_size,), jnp.float32),
        "w1": xavier(k1, in_size, hidden_size),
        "b1": jnp.zeros((hidden_size,), jnp.float32),
        "w2": xavier(k2, hidden_size, hidden_size),
        "b2": jnp.zeros((hidden_size,), jnp.float32),
        "w3": xavier(k3, hidden_size, hidden_size),
        "b3": jnp.zeros((hidden_size,), jnp.float32),
    }


def subnet_reference(x, p, matmul_dtype=jnp.bfloat16, eps=1e-5):
    """BN (train-mode batch stats) folded into linear_1, bf16 matmul, f32 acc."""
    x = x.astype(jnp.float32)
    mean = jnp.mean(x, axis=0)
    var = jnp.mean(jnp.square(x - mean), axis=0)
    scale = p["gamma"] * jax.lax.rsqrt(var + eps)
    shift = p["beta"] - mean * scale
    w1_fold = p["w1"] * scale[:, None]
    b1_fold = p["b1"] + shift @ p["w1"]

    def mm(a, w):
        return jnp.dot(a.astype(matmul_dtype), w.astype(matmul_dtype),
                       preferred_element_type=jnp.float32)

    y1 = jax.nn.relu(mm(x, w1_fold) + b1_fold)
    y2 = jax.nn.relu(mm(y1, p["w2"]) + p["b2"])
    y3 = jax.nn.relu(mm(y2, p["w3"]) + p["b3"])
    return y3


# --------------------------------------------------------------------------
if __name__ == "__main__":
    batch, in_size, hidden_size = 8, 16, 32

    key = jax.random.PRNGKey(0)
    kx, kp = jax.random.split(key)
    x = jax.random.normal(kx, (batch, in_size), jnp.float32)
    params = init_params(kp, in_size, hidden_size)

    out = jax.block_until_ready(subnet_forward(x, params))
    assert out.shape == (batch, hidden_size)

    ref = subnet_reference(x, params)
    max_err = float(jnp.max(jnp.abs(out - ref)))
    assert jnp.allclose(out, ref, atol=2e-2, rtol=2e-2), (
        f"mismatch vs reference, max abs err = {max_err}")

    print("KERNEL_OK")
</pallas_src>

<mosaic_0001>
module attributes {stable_mosaic.version = 11 : i64} {
  func.func @_subnet_fwd_kernel(%arg0: i32, %arg1: memref<8x16xf32, #tpu.memory_space<vmem>>, %arg2: memref<16x128xbf16, #tpu.memory_space<vmem>>, %arg3: memref<1x128xf32, #tpu.memory_space<vmem>>, %arg4: memref<128x128xbf16, #tpu.memory_space<vmem>>, %arg5: memref<1x128xf32, #tpu.memory_space<vmem>>, %arg6: memref<128x128xbf16, #tpu.memory_space<vmem>>, %arg7: memref<1x128xf32, #tpu.memory_space<vmem>>, %arg8: memref<8x128xf32, #tpu.memory_space<vmem>>) attributes {dimension_semantics = [#tpu.dimension_semantics<parallel>], iteration_bounds = array<i64: 1>, scalar_prefetch = 0 : i64, scratch_operands = 0 : i64, tpu.core_type = #tpu.core_type<tc>, window_params = [{transform_indices = @transform_0, window_bounds = array<i64: 8, 16>}, {pipeline_mode = #tpu.pipeline_mode<synchronous>, transform_indices = @transform_1, window_bounds = array<i64: 16, 128>}, {pipeline_mode = #tpu.pipeline_mode<synchronous>, transform_indices = @transform_2, window_bounds = array<i64: 1, 128>}, {pipeline_mode = #tpu.pipeline_mode<synchronous>, transform_indices = @transform_3, window_bounds = array<i64: 128, 128>}, {pipeline_mode = #tpu.pipeline_mode<synchronous>, transform_indices = @transform_4, window_bounds = array<i64: 1, 128>}, {pipeline_mode = #tpu.pipeline_mode<synchronous>, transform_indices = @transform_5, window_bounds = array<i64: 128, 128>}, {pipeline_mode = #tpu.pipeline_mode<synchronous>, transform_indices = @transform_6, window_bounds = array<i64: 1, 128>}, {transform_indices = @transform_7, window_bounds = array<i64: 8, 128>}]} {
    %c0 = arith.constant 0 : index
    %c0_0 = arith.constant 0 : index
    %0 = vector.load %arg1[%c0, %c0_0] : memref<8x16xf32, #tpu.memory_space<vmem>>, vector<8x16xf32>
    %1 = arith.truncf %0 : vector<8x16xf32> to vector<8x16xbf16>
    %c0_1 = arith.constant 0 : index
    %c0_2 = arith.constant 0 : index
    %2 = vector.load %arg2[%c0_1, %c0_2] : memref<16x128xbf16, #tpu.memory_space<vmem>>, vector<16x128xbf16>
    %cst = arith.constant dense<0.000000e+00> : vector<8x128xf32>
    %3 = tpu.matmul %1, %2, %cst {dimension_numbers = #tpu.dot_dimension_numbers<[1], [0], [0], [1], [0, 0, 1, 1], [], []>} : vector<8x16xbf16>, vector<16x128xbf16>, vector<8x128xf32> -> vector<8x128xf32>
    %c0_3 = arith.constant 0 : index
    %c0_4 = arith.constant 0 : index
    %4 = vector.load %arg3[%c0_3, %c0_4] : memref<1x128xf32, #tpu.memory_space<vmem>>, vector<1x128xf32>
    %5 = vector.broadcast %4 : vector<1x128xf32> to vector<8x128xf32>
    %6 = arith.addf %3, %5 : vector<8x128xf32>
    %cst_5 = arith.constant 0.000000e+00 : f32
    %7 = vector.broadcast %cst_5 : f32 to vector<8x128xf32>
    %8 = arith.maximumf %6, %7 : vector<8x128xf32>
    %9 = arith.truncf %8 : vector<8x128xf32> to vector<8x128xbf16>
    %c0_6 = arith.constant 0 : index
    %c0_7 = arith.constant 0 : index
    %10 = vector.load %arg4[%c0_6, %c0_7] : memref<128x128xbf16, #tpu.memory_space<vmem>>, vector<128x128xbf16>
    %cst_8 = arith.constant dense<0.000000e+00> : vector<8x128xf32>
    %11 = tpu.matmul %9, %10, %cst_8 {dimension_numbers = #tpu.dot_dimension_numbers<[1], [0], [0], [1], [0, 0, 1, 1], [], []>} : vector<8x128xbf16>, vector<128x128xbf16>, vector<8x128xf32> -> vector<8x128xf32>
    %c0_9 = arith.constant 0 : index
    %c0_10 = arith.constant 0 : index
    %12 = vector.load %arg5[%c0_9, %c0_10] : memref<1x128xf32, #tpu.memory_space<vmem>>, vector<1x128xf32>
    %13 = vector.broadcast %12 : vector<1x128xf32> to vector<8x128xf32>
    %14 = arith.addf %11, %13 : vector<8x128xf32>
    %cst_11 = arith.constant 0.000000e+00 : f32
    %15 = vector.broadcast %cst_11 : f32 to vector<8x128xf32>
    %16 = arith.maximumf %14, %15 : vector<8x128xf32>
    %17 = arith.truncf %16 : vector<8x128xf32> to vector<8x128xbf16>
    %c0_12 = arith.constant 0 : index
    %c0_13 = arith.constant 0 : index
    %18 = vector.load %arg6[%c0_12, %c0_13] : memref<128x128xbf16, #tpu.memory_space<vmem>>, vector<128x128xbf16>
    %cst_14 = arith.constant dense<0.000000e+00> : vector<8x128xf32>
    %19 = tpu.matmul %17, %18, %cst_14 {dimension_numbers = #tpu.dot_dimension_numbers<[1], [0], [0], [1], [0, 0, 1, 1], [], []>} : vector<8x128xbf16>, vector<128x128xbf16>, vector<8x128xf32> -> vector<8x128xf32>
    %c0_15 = arith.constant 0 : index
    %c0_16 = arith.constant 0 : index
    %20 = vector.load %arg7[%c0_15, %c0_16] : memref<1x128xf32, #tpu.memory_space<vmem>>, vector<1x128xf32>
    %21 = vector.broadcast %20 : vector<1x128xf32> to vector<8x128xf32>
    %22 = arith.addf %19, %21 : vector<8x128xf32>
    %cst_17 = arith.constant 0.000000e+00 : f32
    %23 = vector.broadcast %cst_17 : f32 to vector<8x128xf32>
    %24 = arith.maximumf %22, %23 : vector<8x128xf32>
    %c0_18 = arith.constant 0 : index
    %c0_19 = arith.constant 0 : index
    %25 = vector.load %arg8[%c0_18, %c0_19] : memref<8x128xf32, #tpu.memory_space<vmem>>, vector<8x128xf32>
    tpu.vector_store %arg8[%c0_18, %c0_19], %24 {strides = array<i32>} : memref<8x128xf32, #tpu.memory_space<vmem>>, vector<8x128xf32>,
    return
  }
  func.func @transform_0(%arg0: i32) -> (i32, i32) {
    %c0_i32 = arith.constant 0 : i32
    %c0_i32_0 = arith.constant 0 : i32
    return %arg0, %c0_i32 : i32, i32
  }
  func.func @transform_1(%arg0: i32) -> (i32, i32) {
    %c0_i32 = arith.constant 0 : i32
    %c0_i32_0 = arith.constant 0 : i32
    %c0_i32_1 = arith.constant 0 : i32
    return %c0_i32, %c0_i32_0 : i32, i32
  }
  func.func @transform_2(%arg0: i32) -> (i32, i32) {
    %c0_i32 = arith.constant 0 : i32
    %c0_i32_0 = arith.constant 0 : i32
    %c0_i32_1 = arith.constant 0 : i32
    return %c0_i32, %c0_i32_0 : i32, i32
  }
  func.func @transform_3(%arg0: i32) -> (i32, i32) {
    %c0_i32 = arith.constant 0 : i32
    %c0_i32_0 = arith.constant 0 : i32
    %c0_i32_1 = arith.constant 0 : i32
    return %c0_i32, %c0_i32_0 : i32, i32
  }
  func.func @transform_4(%arg0: i32) -> (i32, i32) {
    %c0_i32 = arith.constant 0 : i32
    %c0_i32_0 = arith.constant 0 : i32
    %c0_i32_1 = arith.constant 0 : i32
    return %c0_i32, %c0_i32_0 : i32, i32
  }
  func.func @transform_5(%arg0: i32) -> (i32, i32) {
    %c0_i32 = arith.constant 0 : i32
    %c0_i32_0 = arith.constant 0 : i32
    %c0_i32_1 = arith.constant 0 : i32
    return %c0_i32, %c0_i32_0 : i32, i32
  }
  func.func @transform_6(%arg0: i32) -> (i32, i32) {
    %c0_i32 = arith.constant 0 : i32
    %c0_i32_0 = arith.constant 0 : i32
    %c0_i32_1 = arith.constant 0 : i32
    return %c0_i32, %c0_i32_0 : i32, i32
  }
  func.func @transform_7(%arg0: i32) -> (i32, i32) {
    %c0_i32 = arith.constant 0 : i32
    %c0_i32_0 = arith.constant 0 : i32
    return %arg0, %c0_i32 : i32, i32
  }
}

</mosaic_0001>

<llo_original>
// kernel: tpu_custom_call.1
$region0: #{tpu_custom_call.1}
  #allocation0 [shape = 'u32[]', space=smem, size = 0x4, offset = 0x4, fixed_abs, tag = 'smem constant byte address 0x4 - core index']
  #allocation1 [shape = 'u32[72,128]{1,0:T(1,128)}', space=vmem, size = 0x9000, scoped, tag = 'internal scratch']
  %s0 = inlined_call_operand.hbm [shape: f32[8,16], index: 0, kind: input, shape index: {}]
  %s1 = inlined_call_operand.hbm [shape: bf16[16,128], index: 1, kind: input, shape index: {}]
  %s2 = inlined_call_operand.vmem [shape: f32[1,128], index: 2, kind: input, shape index: {}]
  %s3 = inlined_call_operand.hbm [shape: bf16[128,128], index: 3, kind: input, shape index: {}]
  %s4 = inlined_call_operand.vmem [shape: f32[1,128], index: 4, kind: input, shape index: {}]
  %s5 = inlined_call_operand.hbm [shape: bf16[128,128], index: 5, kind: input, shape index: {}]
  %s6 = inlined_call_operand.vmem [shape: f32[1,128], index: 6, kind: input, shape index: {}]
  %s7 = inlined_call_operand.hbm [shape: f32[8,128], index: 7, kind: output, shape index: {}]
  %s8 = sld [smem:[#allocation0]]
  $region54: #{tpu_custom_call.1} parent=0
    _
  %s10 = ssub.s32 1, %s8
  %s11 = scalar_select 0, %s10, %s8
  $region1: #{tpu_custom_call.1} parent=0
    #allocation2 [shape = 'u8[4096]{0}', space=vmem, size = 0x1000, scoped, tag = 'input window, operand 0, single buffered']
    #allocation3 [shape = 's32[1]{0}', space=sflag, size = 0x4, scoped, tag = 'scoped memory for tpu_custom_call.1']
    #allocation4 [shape = 's32[1]{0}', space=sflag, size = 0x4, scoped, tag = 'scoped memory for tpu_custom_call.1']
    #allocation5 [shape = 'u8[4096]{0}', space=vmem, size = 0x1000, scoped, tag = 'input window, operand 1, single buffered']
    #allocation6 [shape = 's32[1]{0}', space=sflag, size = 0x4, scoped, tag = 'scoped memory for tpu_custom_call.1']
    #allocation7 [shape = 'u8[32768]{0}', space=vmem, size = 0x8000, scoped, tag = 'input window, operand 3, single buffered']
    #allocation8 [shape = 'u8[32768]{0}', space=vmem, size = 0x8000, scoped, tag = 'input window, operand 5, single buffered']
    #allocation9 [shape = 's32[1]{0}', space=sflag, size = 0x4, scoped, tag = 'scoped memory for tpu_custom_call.1']
    #allocation10 [shape = 'u8[4096]{0}', space=vmem, size = 0x1000, scoped, tag = 'output window, operand 0, single buffered']
    %12 = vsyncpa [#allocation3], 0
    %13 = vsyncpa [#allocation6], 0
    %14 = vsyncpa [#allocation9], 0
    %15 = vsyncpa [#allocation4], 0
    // Predicated region
    $region2: #{tpu_custom_call.1} parent=1 // pred_check
      _
    $region3: #{tpu_custom_call.1} parent=1 // pred_check_branch
      %17 = sbr.rel (0) target = $region5
    $region4: #{tpu_custom_call.1} parent=1 // pred_region
      %19 = vsyncadd [#allocation3], 0
      %s21 = sshll.u32 %s0, 4
      %s22 = int_to_ptr.hbm [resolvable:$true] %s21
      %s23 = sshll.u32 [#allocation2], 4
      %s24 = int_to_ptr.vmem [resolvable:$true] %s23
      %26 = dma.hbm_to_vmem [thread:$0]  %s22, 128, %s24, [#allocation3]
    $region5: #{tpu_custom_call.1} parent=1 // pred_fallthru
      _
    // Predicated region
    $region6: #{tpu_custom_call.1} parent=1 // pred_check
      _
    $region7: #{tpu_custom_call.1} parent=1 // pred_check_branch
      %28 = sbr.rel (0) target = $region9
    $region8: #{tpu_custom_call.1} parent=1 // pred_region
      %30 = vsyncadd [#allocation6], 0
      %s31 = sshll.u32 %s1, 4
      %s32 = int_to_ptr.hbm [resolvable:$true] %s31
      %s33 = sshll.u32 [#allocation5], 4
      %s34 = int_to_ptr.vmem [resolvable:$true] %s33
      %39 = dma.hbm_to_vmem [thread:$0]  %s32, 128, %s34, [#allocation6], 64, 64, 4
    $region9: #{tpu_custom_call.1} parent=1 // pred_fallthru
      _
    // Predicated region
    $region10: #{tpu_custom_call.1} parent=1 // pred_check
      _
    $region11: #{tpu_custom_call.1} parent=1 // pred_check_branch
      %41 = sbr.rel (0) target = $region13
    $region12: #{tpu_custom_call.1} parent=1 // pred_region
      _
    $region13: #{tpu_custom_call.1} parent=1 // pred_fallthru
      _
    // Predicated region
    $region14: #{tpu_custom_call.1} parent=1 // pred_check
      _
    $region15: #{tpu_custom_call.1} parent=1 // pred_check_branch
      %43 = sbr.rel (0) target = $region17
    $region16: #{tpu_custom_call.1} parent=1 // pred_region
      %45 = vsyncadd [#allocation6], 0
      %s46 = sshll.u32 %s3, 4
      %s47 = int_to_ptr.hbm [resolvable:$true] %s46
      %s48 = sshll.u32 [#allocation7], 4
      %s49 = int_to_ptr.vmem [resolvable:$true] %s48
      %54 = dma.hbm_to_vmem [thread:$0]  %s47, 1024, %s49, [#allocation6], 64, 64, 4
    $region17: #{tpu_custom_call.1} parent=1 // pred_fallthru
      _
    // Predicated region
    $region18: #{tpu_custom_call.1} parent=1 // pred_check
      _
    $region19: #{tpu_custom_call.1} parent=1 // pred_check_branch
      %56 = sbr.rel (0) target = $region21
    $region20: #{tpu_custom_call.1} parent=1 // pred_region
      _
    $region21: #{tpu_custom_call.1} parent=1 // pred_fallthru
      _
    // Predicated region
    $region22: #{tpu_custom_call.1} parent=1 // pred_check
      _
    $region23: #{tpu_custom_call.1} parent=1 // pred_check_branch
      %58 = sbr.rel (0) target = $region25
    $region24: #{tpu_custom_call.1} parent=1 // pred_region
      %60 = vsyncadd [#allocation9], 0
      %s61 = sshll.u32 %s5, 4
      %s62 = int_to_ptr.hbm [resolvable:$true] %s61
      %s63 = sshll.u32 [#allocation8], 4
      %s64 = int_to_ptr.vmem [resolvable:$true] %s63
      %69 = dma.hbm_to_vmem [thread:$0]  %s62, 1024, %s64, [#allocation9], 64, 64, 4
    $region25: #{tpu_custom_call.1} parent=1 // pred_fallthru
      _
    // Predicated region
    $region26: #{tpu_custom_call.1} parent=1 // pred_check
      _
    $region27: #{tpu_custom_call.1} parent=1 // pred_check_branch
      %71 = sbr.rel (0) target = $region29
    $region28: #{tpu_custom_call.1} parent=1 // pred_region
      _
    $region29: #{tpu_custom_call.1} parent=1 // pred_fallthru
      _
    // Predicated region
    $region30: #{tpu_custom_call.1} parent=1 // pred_check
      _
    $region31: #{tpu_custom_call.1} parent=1 // pred_check_branch
      %73 = sbr.rel (0) target = $region33
    $region32: #{tpu_custom_call.1} parent=1 // pred_region
      %75 = dma.done [#allocation3], 128
    $region33: #{tpu_custom_call.1} parent=1 // pred_fallthru
      _
    // Predicated region
    $region34: #{tpu_custom_call.1} parent=1 // pred_check
      _
    $region35: #{tpu_custom_call.1} parent=1 // pred_check_branch
      %77 = sbr.rel (0) target = $region37
    $region36: #{tpu_custom_call.1} parent=1 // pred_region
      %79 = dma.done [#allocation6], 128
    $region37: #{tpu_custom_call.1} parent=1 // pred_fallthru
      _
    // Predicated region
    $region38: #{tpu_custom_call.1} parent=1 // pred_check
      _
    $region39: #{tpu_custom_call.1} parent=1 // pred_check_branch
      %81 = sbr.rel (0) target = $region41
    $region40: #{tpu_custom_call.1} parent=1 // pred_region
      %83 = dma.done [#allocation6], 1024
    $region41: #{tpu_custom_call.1} parent=1 // pred_fallthru
      _
    // Predicated region
    $region42: #{tpu_custom_call.1} parent=1 // pred_check
      _
    $region43: #{tpu_custom_call.1} parent=1 // pred_check_branch
      %85 = sbr.rel (0) target = $region45
    $region44: #{tpu_custom_call.1} parent=1 // pred_region
      %87 = dma.done [#allocation9], 1024
    $region45: #{tpu_custom_call.1} parent=1 // pred_fallthru
      _
    %v89 = vld [vmem:[#allocation2] sm:$0xff]
    %v90 = vpack.c.bf16 %v89, %v89
    %v91 = vld [vmem:[#allocation5] sm:$0xf]
    %v92 = vld [vmem:[#allocation5 + $0x4] sm:$0xf]
    %v93 = vld [vmem:[%s2] sm:$0x1]
    %v95 = vperm.slane %v93, 0
    %v99 = vunpack.c.l.b16 %v91
    %v100 = vunpack.c.l.b16 %v92
    %v101 = vpack.c.b16 %v100, %v99
    %vm103 = vcmask 130048
    %v105 = vsel %vm103, %v90, 0
    %107 = vmatpush.bf16.msra.mxu0 0
    %108 = vmatpush.bf16.msra.mxu0 0
    %109 = vmatpush.bf16.msra.mxu0 0
    %110 = vmatpush.bf16.msra.mxu0 0
    %111 = vmatpush.bf16.msra.mxu0 0
    %112 = vmatpush.bf16.msra.mxu0 0
    %113 = vmatpush.bf16.msra.mxu0 0
    %114 = vmatpush.bf16.msra.mxu0 %v101
    %115 = vmatmul.bf16.gmra.mxu0 %v105
    %v116 = vpop.f32.mrf.mxu0
    %v117 = vadd.f32 %v95, %v116
    %v118 = vpop.f32.mrf.mxu0
    %119 = vdwg.mxu0
    %v120 = vmax.f32 %v117, 0.0
    %v121 = vpack.c.bf16 %v120, %v120
    %v122 = vld [vmem:[#allocation7] sm:$0xf]
    %v123 = vld [vmem:[#allocation7 + $0x4] sm:$0xf]
    %v124 = vld [vmem:[#allocation7 + $0x8] sm:$0xf]
    %v125 = vld [vmem:[#allocation7 + $0xc] sm:$0xf]
    %v126 = vld [vmem:[#allocation7 + $0x10] sm:$0xf]
    %v127 = vld [vmem:[#allocation7 + $0x14] sm:$0xf]
    %v128 = vld [vmem:[#allocation7 + $0x18] sm:$0xf]
    %v129 = vld [vmem:[#allocation7 + $0x1c] sm:$0xf]
    %v130 = vld [vmem:[#allocation7 + $0x20] sm:$0xf]
    %v131 = vld [vmem:[#allocation7 + $0x24] sm:$0xf]
    %v132 = vld [vmem:[#allocation7 + $0x28] sm:$0xf]
    %v133 = vld [vmem:[#allocation7 + $0x2c] sm:$0xf]
    %v134 = vld [vmem:[#allocation7 + $0x30] sm:$0xf]
    %v135 = vld [vmem:[#allocation7 + $0x34] sm:$0xf]
    %v136 = vld [vmem:[#allocation7 + $0x38] sm:$0xf]
    %v137 = vld [vmem:[#allocation7 + $0x3c] sm:$0xf]
    %v138 = vld [vmem:[%s4] sm:$0x1]
    %v140 = vperm.slane %v138, 0
    %v158 = vunpack.c.l.b16 %v122
    %v159 = vunpack.c.l.b16 %v123
    %v160 = vunpack.c.l.b16 %v124
    %v161 = vunpack.c.l.b16 %v125
    %v162 = vunpack.c.l.b16 %v126
    %v163 = vunpack.c.l.b16 %v127
    %v164 = vunpack.c.l.b16 %v128
    %v165 = vunpack.c.l.b16 %v129
    %v166 = vunpack.c.l.b16 %v130
    %v167 = vunpack.c.l.b16 %v131
    %v168 = vunpack.c.l.b16 %v132
    %v169 = vunpack.c.l.b16 %v133
    %v170 = vunpack.c.l.b16 %v134
    %v171 = vunpack.c.l.b16 %v135
    %v172 = vunpack.c.l.b16 %v136
    %v173 = vunpack.c.l.b16 %v137
    %v174 = vpack.c.b16 %v159, %v158
    %v175 = vpack.c.b16 %v161, %v160
    %v176 = vpack.c.b16 %v163, %v162
    %v177 = vpack.c.b16 %v165, %v164
    %v178 = vpack.c.b16 %v167, %v166
    %v179 = vpack.c.b16 %v169, %v168
    %v180 = vpack.c.b16 %v171, %v170
    %v181 = vpack.c.b16 %v173, %v172
    %190 = vmatpush.bf16.msra.mxu0 %v181
    %191 = vmatpush.bf16.msra.mxu0 %v180
    %192 = vmatpush.bf16.msra.mxu0 %v179
    %193 = vmatpush.bf16.msra.mxu0 %v178
    %194 = vmatpush.bf16.msra.mxu0 %v177
    %195 = vmatpush.bf16.msra.mxu0 %v176
    %196 = vmatpush.bf16.msra.mxu0 %v175
    %197 = vmatpush.bf16.msra.mxu0 %v174
    %198 = vmatmul.bf16.gmra.mxu0 %v121
    %v199 = vpop.f32.mrf.mxu0
    %v200 = vadd.f32 %v140, %v199
    %v201 = vpop.f32.mrf.mxu0
    %202 = vdwg.mxu0
    %v203 = vmax.f32 %v200, 0.0
    %v204 = vpack.c.bf16 %v203, %v203
    %v205 = vld [vmem:[#allocation8] sm:$0xf]
    %v206 = vld [vmem:[#allocation8 + $0x4] sm:$0xf]
    %v207 = vld [vmem:[#allocation8 + $0x8] sm:$0xf]
    %v208 = vld [vmem:[#allocation8 + $0xc] sm:$0xf]
    %v209 = vld [vmem:[#allocation8 + $0x10] sm:$0xf]
    %v210 = vld [vmem:[#allocation8 + $0x14] sm:$0xf]
    %v211 = vld [vmem:[#allocation8 + $0x18] sm:$0xf]
    %v212 = vld [vmem:[#allocation8 + $0x1c] sm:$0xf]
    %v213 = vld [vmem:[#allocation8 + $0x20] sm:$0xf]
    %v214 = vld [vmem:[#allocation8 + $0x24] sm:$0xf]
    %v215 = vld [vmem:[#allocation8 + $0x28] sm:$0xf]
    %v216 = vld [vmem:[#allocation8 + $0x2c] sm:$0xf]
    %v217 = vld [vmem:[#allocation8 + $0x30] sm:$0xf]
    %v218 = vld [vmem:[#allocation8 + $0x34] sm:$0xf]
    %v219 = vld [vmem:[#allocation8 + $0x38] sm:$0xf]
    %v220 = vld [vmem:[#allocation8 + $0x3c] sm:$0xf]
    %v221 = vld [vmem:[%s6] sm:$0x1]
    %v223 = vperm.slane %v221, 0
    %v241 = vunpack.c.l.b16 %v205
    %v242 = vunpack.c.l.b16 %v206
    %v243 = vunpack.c.l.b16 %v207
    %v244 = vunpack.c.l.b16 %v208
    %v245 = vunpack.c.l.b16 %v209
    %v246 = vunpack.c.l.b16 %v210
    %v247 = vunpack.c.l.b16 %v211
    %v248 = vunpack.c.l.b16 %v212
    %v249 = vunpack.c.l.b16 %v213
    %v250 = vunpack.c.l.b16 %v214
    %v251 = vunpack.c.l.b16 %v215
    %v252 = vunpack.c.l.b16 %v216
    %v253 = vunpack.c.l.b16 %v217
    %v254 = vunpack.c.l.b16 %v218
    %v255 = vunpack.c.l.b16 %v219
    %v256 = vunpack.c.l.b16 %v220
    %v257 = vpack.c.b16 %v242, %v241
    %v258 = vpack.c.b16 %v244, %v243
    %v259 = vpack.c.b16 %v246, %v245
    %v260 = vpack.c.b16 %v248, %v247
    %v261 = vpack.c.b16 %v250, %v249
    %v262 = vpack.c.b16 %v252, %v251
    %v263 = vpack.c.b16 %v254, %v253
    %v264 = vpack.c.b16 %v256, %v255
    %273 = vmatpush.bf16.msra.mxu0 %v264
    %274 = vmatpush.bf16.msra.mxu0 %v263
    %275 = vmatpush.bf16.msra.mxu0 %v262
    %276 = vmatpush.bf16.msra.mxu0 %v261
    %277 = vmatpush.bf16.msra.mxu0 %v260
    %278 = vmatpush.bf16.msra.mxu0 %v259
    %279 = vmatpush.bf16.msra.mxu0 %v258
    %280 = vmatpush.bf16.msra.mxu0 %v257
    %281 = vmatmul.bf16.gmra.mxu0 %v204
    %v282 = vpop.f32.mrf.mxu0
    %v283 = vadd.f32 %v223, %v282
    %v284 = vpop.f32.mrf.mxu0
    %285 = vdwg.mxu0
    %v286 = vmax.f32 %v283, 0.0
    %287 = vst [vmem:[#allocation10] sm:$0xff] %v286
    // Predicated region
    $region46: #{tpu_custom_call.1} parent=1 // pred_check
      _
    $region47: #{tpu_custom_call.1} parent=1 // pred_check_branch
      %289 = sbr.rel (0) target = $region49
    $region48: #{tpu_custom_call.1} parent=1 // pred_region
      %291 = vsyncadd [#allocation4], 0
      %s293 = sshll.u32 [#allocation10], 4
      %s294 = int_to_ptr.vmem [resolvable:$true] %s293
      %s295 = sshll.u32 %s7, 4
      %s296 = int_to_ptr.hbm [resolvable:$true] %s295
      %298 = dma.vmem_to_hbm [thread:$0]  %s294, 128, %s296, [#allocation4]
    $region49: #{tpu_custom_call.1} parent=1 // pred_fallthru
      _
    // Predicated region
    $region50: #{tpu_custom_call.1} parent=1 // pred_check
      _
    $region51: #{tpu_custom_call.1} parent=1 // pred_check_branch
      %300 = sbr.rel (0) target = $region53
    $region52: #{tpu_custom_call.1} parent=1 // pred_region
      %302 = dma.done [#allocation4], 128
    $region53: #{tpu_custom_call.1} parent=1 // pred_fallthru
      _
    %303 = vsyncpa [#allocation3], 1
    %304 = vsyncpa [#allocation6], 1
    %305 = vsyncpa [#allocation9], 1
    %306 = vsyncpa [#allocation4], 1

</llo_original>
